<compile_context>
chip_gen: v7x
topology: tpu7x:2x2x1
jax: 0.10.0
libtpu: 0.0.40
codegen_flags: <defaults>
</compile_context>

<pallas_src>
import functools

import jax
import jax.numpy as jnp
from jax import lax
from jax.experimental import pallas as pl
from jax.experimental.pallas import tpu as pltpu

_MIB = 1024 * 1024


def _vmem_budget_bytes():
    """Scoped-VMEM limit derived from the chip: v5e/v6e (128 MiB physical) ->
    64 MiB, v7x (64 MiB physical) -> 32 MiB."""
    cap = 0
    try:
        cap = int(getattr(pltpu.get_tpu_info(), "vmem_capacity_bytes", 0) or 0)
    except Exception:  # non-TPU tracing / emulation environments
        cap = 0
    if cap <= 0:
        cap = 128 * _MIB
    return int(max(32 * _MIB, min(64 * _MIB, cap // 2)))


def _round_up(v, m):
    return ((v + m - 1) // m) * m


def _choose_tile_n(N, C, itemsize, max_tile_bytes, max_lanes=8192):
    """Lane tile width: a multiple of 128 sized so one (C, tn) tile in the
    input dtype stays under `max_tile_bytes` (the 4 double-buffered in/out
    tiles of kernel 2 then use <= half the scoped-VMEM budget)."""
    budget = max(128, min(max_lanes, max_tile_bytes // max(1, C * itemsize)))
    budget = (budget // 128) * 128
    if N <= budget:
        return _round_up(N, 128)   # single tile covers all of (padded) N
    return budget


def _attn_kernel(x_ref, attn_ref, psum_ref, energy_acc, rowsum_acc, *,
                 energy_dtype):
    """Accumulate energy over N tiles; finalize softmax + analytic psum.

    x_ref      : (1, C, tN) current x tile (input dtype)
    attn_ref   : (1, C, C)  softmax(channel energy), stored in the MXU dtype
    psum_ref   : (1, 1, 1)  sum over all elements of attn @ x
    energy_acc : (C, C) f32 scratch, rowsum_acc : (C, 1) f32 scratch
    """
    n_idx = pl.program_id(1)

    @pl.when(n_idx == 0)
    def _init():
        energy_acc[...] = jnp.zeros_like(energy_acc)
        rowsum_acc[...] = jnp.zeros_like(rowsum_acc)

    x = x_ref[0]                                       # (C, tN) input dtype
    xm = x.astype(energy_dtype)
    # energy += X @ X^T (contract over the spatial/lane axis).
    energy_acc[...] += lax.dot_general(
        xm, xm, (((1,), (1,)), ((), ())),
        preferred_element_type=jnp.float32)
    # Accumulate the row sum in f32 without materializing an f32 tile copy.
    rowsum_acc[...] += jnp.sum(x, axis=-1, dtype=jnp.float32, keepdims=True)

    @pl.when(n_idx == pl.num_programs(1) - 1)
    def _finalize():
        energy = energy_acc[...]                       # (C, C) f32
        # softmax(rowmax(E) - E) == exp(rowmin(E) - E) / rowsum(...)
        e_min = jnp.min(energy, axis=-1, keepdims=True)
        p = jnp.exp(e_min - energy)
        denom = jnp.sum(p, axis=-1, keepdims=True)
        attn = p * pl.reciprocal(denom, approx=False)  # exact: rows sum to 1
        attn_q = attn.astype(attn_ref.dtype)           # store in MXU dtype
        attn_ref[0] = attn_q
        # sum(out_b) = sum_{c,k} attn[c,k] * rowsum_x[k]; use the stored
        # (quantized) attention so the analytic mean matches kernel 2.
        psum = jnp.sum(jnp.dot(attn_q.astype(jnp.float32), rowsum_acc[...],
                               preferred_element_type=jnp.float32))
        psum_ref[...] = jnp.broadcast_to(psum, (1, 1, 1))


def _apply_kernel(attn_ref, x_ref, o_ref, *, matmul_dtype):
    """Fused out = (scaled_attn @ x) + x on one (1, C, tN) tile.  The
    attention arrives already in the MXU dtype (no per-tile cast)."""
    x = x_ref[0]                                       # (C, tN) input dtype
    y = jnp.dot(attn_ref[0], x.astype(matmul_dtype),
                preferred_element_type=jnp.float32)
    o_ref[0] = (y + x.astype(jnp.float32)).astype(o_ref.dtype)


def cam_module_forward(x, gamma, *, matmul_dtype=jnp.bfloat16,
                       energy_dtype=None):
    """Equivalent of CAM_Module.forward (returns `out`, like the module)."""
    B, C, H, W = x.shape
    N = H * W
    if energy_dtype is None:
        energy_dtype = matmul_dtype

    x_itemsize = jnp.dtype(x.dtype).itemsize
    attn_itemsize = jnp.dtype(matmul_dtype).itemsize
    vmem_limit = _vmem_budget_bytes()
    tn = _choose_tile_n(N, C, x_itemsize, max_tile_bytes=vmem_limit // 8)
    n_tiles = pl.cdiv(N, tn)
    N_pad = n_tiles * tn

    x_flat = x.reshape(B, C, N)                        # keep input dtype
    if N_pad != N:
        # Zero lanes change neither the Gram matrix, the rowsum, nor the psum.
        x_flat = jnp.pad(x_flat, ((0, 0), (0, 0), (0, N_pad - N)))

    # --- kernel 1: energy accumulation over N tiles -> attention + psum ---
    cost1 = pl.CostEstimate(
        flops=int(2 * B * C * C * N_pad),
        transcendentals=int(B * C * C),
        bytes_accessed=int(B * C * N_pad * x_itemsize
                           + B * C * C * attn_itemsize + B * 4))
    attn, psums = pl.pallas_call(
        functools.partial(_attn_kernel, energy_dtype=energy_dtype),
        out_shape=(
            jax.ShapeDtypeStruct((B, C, C), matmul_dtype),
            jax.ShapeDtypeStruct((B, 1, 1), jnp.float32),
        ),
        grid=(B, n_tiles),
        in_specs=[pl.BlockSpec((1, C, tn), lambda b, n: (b, 0, n))],
        out_specs=(
            pl.BlockSpec((1, C, C), lambda b, n: (b, 0, 0)),
            pl.BlockSpec((1, 1, 1), lambda b, n: (b, 0, 0)),
        ),
        scratch_shapes=[
            pltpu.VMEM((C, C), jnp.float32),
            pltpu.VMEM((C, 1), jnp.float32),
        ],
        compiler_params=pltpu.CompilerParams(
            dimension_semantics=("parallel", "arbitrary"),
            vmem_limit_bytes=vmem_limit),
        cost_estimate=cost1,
    )(x_flat)

    # Global mean over ALL elements of out (matches torch.mean(out)); fold the
    # gamma / mean scale into the tiny attention tensor so kernel 2 needs no
    # scalar operand:  gamma * (attn @ x) / mean + x == (scale*attn) @ x + x.
    mean = jnp.sum(psums) / jnp.float32(B * C * N)
    scale = (gamma.reshape(()) / mean).astype(jnp.float32)
    attn_scaled = (attn.astype(jnp.float32) * scale).astype(matmul_dtype)

    # --- kernel 2: fused (scaled attention @ x) + residual, tiled over N ---
    cost2 = pl.CostEstimate(
        flops=int(2 * B * C * C * N_pad + B * C * N_pad),
        transcendentals=0,
        bytes_accessed=int(2 * B * C * N_pad * x_itemsize
                           + B * C * C * attn_itemsize))
    out_flat = pl.pallas_call(
        functools.partial(_apply_kernel, matmul_dtype=matmul_dtype),
        out_shape=jax.ShapeDtypeStruct((B, C, N_pad), x.dtype),
        grid=(B, n_tiles),
        in_specs=[
            pl.BlockSpec((1, C, C), lambda b, n: (b, 0, 0)),   # scaled attn
            pl.BlockSpec((1, C, tn), lambda b, n: (b, 0, n)),  # x tile
        ],
        out_specs=pl.BlockSpec((1, C, tn), lambda b, n: (b, 0, n)),
        compiler_params=pltpu.CompilerParams(
            dimension_semantics=("parallel", "parallel"),
            vmem_limit_bytes=vmem_limit),
        cost_estimate=cost2,
    )(attn_scaled, x_flat)

    if N_pad != N:
        out_flat = out_flat[:, :, :N]
    return out_flat.reshape(B, C, H, W)


def cam_module_reference(x, gamma):
    """Pure-JAX (f32, highest precision) reference mirroring the PyTorch module."""
    B, C, H, W = x.shape
    q = x.reshape(B, C, -1).astype(jnp.float32)
    energy = jnp.einsum("bcn,bkn->bck", q, q, precision=lax.Precision.HIGHEST)
    energy_new = jnp.max(energy, axis=-1, keepdims=True) - energy
    attention = jax.nn.softmax(energy_new, axis=-1)
    out = jnp.einsum("bck,bkn->bcn", attention, q,
                     precision=lax.Precision.HIGHEST).reshape(B, C, H, W)
    mean = jnp.mean(out)
    out = out / mean
    return gamma.reshape(()) * out + x.astype(jnp.float32)


if __name__ == "__main__":
    key = jax.random.PRNGKey(0)
    B, C, H, W = 2, 4, 16, 16
    # Small spread + positive offset keeps the global mean(out) (which the
    # module divides by) well conditioned for the numerical comparison.
    x = 0.1 * jax.random.normal(key, (B, C, H, W), dtype=jnp.float32) + 0.25

    # gamma init per CAM_Module.__init__ (zeros): out must equal x.
    gamma0 = jnp.zeros((1,), dtype=jnp.float32)
    out0 = jax.block_until_ready(cam_module_forward(x, gamma0))
    ref0 = cam_module_reference(x, gamma0)
    assert out0.shape == (B, C, H, W)
    assert jnp.allclose(out0, ref0, atol=1e-5, rtol=1e-5)

    # Non-zero gamma exercises the full attention + scale + residual path.
    gamma1 = jnp.full((1,), 0.5, dtype=jnp.float32)
    ref1 = cam_module_reference(x, gamma1)

    out_bf16 = jax.block_until_ready(cam_module_forward(x, gamma1))
    assert jnp.allclose(out_bf16, ref1, atol=5e-2, rtol=5e-2)  # bf16 MXU operands

    out_f32 = jax.block_until_ready(
        cam_module_forward(x, gamma1, matmul_dtype=jnp.float32))
    assert jnp.allclose(out_f32, ref1, atol=5e-2, rtol=5e-2)

    # Mixed precision: f32 energy accumulation, bf16 memory-bound apply pass.
    out_mixed = jax.block_until_ready(
        cam_module_forward(x, gamma1, energy_dtype=jnp.float32))
    assert jnp.allclose(out_mixed, ref1, atol=5e-2, rtol=5e-2)

    # bf16 input exercises the dtype-aware lane-tile sizing.
    x_bf16 = x.astype(jnp.bfloat16)
    ref_bf16_in = cam_module_reference(x_bf16, gamma1)
    out_bf16_in = jax.block_until_ready(cam_module_forward(x_bf16, gamma1))
    assert out_bf16_in.dtype == jnp.bfloat16
    assert jnp.allclose(out_bf16_in.astype(jnp.float32), ref_bf16_in,
                        atol=5e-2, rtol=5e-2)

    # Non-multiple-of-128 spatial size exercises the zero-padding path.
    Hp, Wp = 10, 10
    xp = 0.1 * jax.random.normal(jax.random.PRNGKey(1), (B, C, Hp, Wp),
                                 dtype=jnp.float32) + 0.25
    refp = cam_module_reference(xp, gamma1)
    outp = jax.block_until_ready(cam_module_forward(xp, gamma1))
    assert outp.shape == (B, C, Hp, Wp)
    assert jnp.allclose(outp, refp, atol=5e-2, rtol=5e-2)

    print("KERNEL_OK")
</pallas_src>

<mosaic_0001>
module attributes {stable_mosaic.version = 11 : i64} {
  func.func @_attn_kernel(%arg0: i32, %arg1: i32, %arg2: memref<1x4x256xf32, #tpu.memory_space<vmem>>, %arg3: memref<1x4x4xbf16, #tpu.memory_space<vmem>>, %arg4: memref<1x1x1xf32, #tpu.memory_space<vmem>>, %arg5: memref<4x4xf32, #tpu.memory_space<vmem>>, %arg6: memref<4x1xf32, #tpu.memory_space<vmem>>) attributes {dimension_semantics = [#tpu.dimension_semantics<parallel>, #tpu.dimension_semantics<arbitrary>], iteration_bounds = array<i64: 2, 1>, scalar_prefetch = 0 : i64, scratch_operands = 2 : i64, tpu.core_type = #tpu.core_type<tc>, window_params = [{transform_indices = @transform_0, window_bounds = array<i64: 1, 4, 256>}, {transform_indices = @transform_1, window_bounds = array<i64: 1, 4, 4>}, {transform_indices = @transform_2, window_bounds = array<i64: 1, 1, 1>}]} {
    %c0_i32 = arith.constant 0 : i32
    %0 = arith.cmpi eq, %arg1, %c0_i32 : i32
    %1 = arith.extui %0 : i1 to i32
    %c0_i32_0 = arith.constant 0 : i32
    %2 = arith.cmpi ne, %1, %c0_i32_0 : i32
    scf.if %2 {
      %cst_14 = arith.constant 0.000000e+00 : f32
      %18 = vector.broadcast %cst_14 : f32 to vector<4x4xf32>
      %c0_15 = arith.constant 0 : index
      %c0_16 = arith.constant 0 : index
      %19 = vector.load %arg5[%c0_15, %c0_16] : memref<4x4xf32, #tpu.memory_space<vmem>>, vector<4x4xf32>
      tpu.vector_store %arg5[%c0_15, %c0_16], %18 {strides = array<i32>} : memref<4x4xf32, #tpu.memory_space<vmem>>, vector<4x4xf32>,
      %cst_17 = arith.constant 0.000000e+00 : f32
      %20 = vector.broadcast %cst_17 : f32 to vector<4x1xf32>
      %c0_18 = arith.constant 0 : index
      %c0_19 = arith.constant 0 : index
      %21 = vector.load %arg6[%c0_18, %c0_19] : memref<4x1xf32, #tpu.memory_space<vmem>>, vector<4x1xf32>
      tpu.vector_store %arg6[%c0_18, %c0_19], %20 {strides = array<i32>} : memref<4x1xf32, #tpu.memory_space<vmem>>, vector<4x1xf32>,
    } else {
    }
    %c0 = arith.constant 0 : index
    %c0_1 = arith.constant 0 : index
    %c0_2 = arith.constant 0 : index
    %3 = vector.load %arg2[%c0, %c0_1, %c0_2] : memref<1x4x256xf32, #tpu.memory_space<vmem>>, vector<1x4x256xf32>
    %4 = vector.shape_cast %3 : vector<1x4x256xf32> to vector<4x256xf32>
    %5 = arith.truncf %4 : vector<4x256xf32> to vector<4x256xbf16>
    %c0_3 = arith.constant 0 : index
    %c0_4 = arith.constant 0 : index
    %6 = vector.load %arg5[%c0_3, %c0_4] : memref<4x4xf32, #tpu.memory_space<vmem>>, vector<4x4xf32>
    %cst = arith.constant dense<0.000000e+00> : vector<4x4xf32>
    %7 = tpu.matmul %5, %5, %cst {dimension_numbers = #tpu.dot_dimension_numbers<[1], [1], [0], [0], [0, 0, 1, 0], [], []>} : vector<4x256xbf16>, vector<4x256xbf16>, vector<4x4xf32> -> vector<4x4xf32>
    %8 = arith.addf %6, %7 : vector<4x4xf32>
    %c0_5 = arith.constant 0 : index
    %c0_6 = arith.constant 0 : index
    %9 = vector.load %arg5[%c0_5, %c0_6] : memref<4x4xf32, #tpu.memory_space<vmem>>, vector<4x4xf32>
    tpu.vector_store %arg5[%c0_5, %c0_6], %8 {strides = array<i32>} : memref<4x4xf32, #tpu.memory_space<vmem>>, vector<4x4xf32>,
    %c0_7 = arith.constant 0 : index
    %c0_8 = arith.constant 0 : index
    %10 = vector.load %arg6[%c0_7, %c0_8] : memref<4x1xf32, #tpu.memory_space<vmem>>, vector<4x1xf32>
    %cst_9 = arith.constant dense<0.000000e+00> : vector<4xf32>
    %11 = vector.multi_reduction <add>, %4, %cst_9 [1] : vector<4x256xf32> to vector<4xf32>
    %12 = vector.shape_cast %11 : vector<4xf32> to vector<4x1xf32>
    %13 = arith.addf %10, %12 : vector<4x1xf32>
    %c0_10 = arith.constant 0 : index
    %c0_11 = arith.constant 0 : index
    %14 = vector.load %arg6[%c0_10, %c0_11] : memref<4x1xf32, #tpu.memory_space<vmem>>, vector<4x1xf32>
    tpu.vector_store %arg6[%c0_10, %c0_11], %13 {strides = array<i32>} : memref<4x1xf32, #tpu.memory_space<vmem>>, vector<4x1xf32>,
    %c0_i32_12 = arith.constant 0 : i32
    %15 = arith.cmpi eq, %arg1, %c0_i32_12 : i32
    %16 = arith.extui %15 : i1 to i32
    %c0_i32_13 = arith.constant 0 : i32
    %17 = arith.cmpi ne, %16, %c0_i32_13 : i32
    scf.if %17 {
      %c0_14 = arith.constant 0 : index
      %c0_15 = arith.constant 0 : index
      %18 = vector.load %arg5[%c0_14, %c0_15] : memref<4x4xf32, #tpu.memory_space<vmem>>, vector<4x4xf32>
      %cst_16 = arith.constant dense<0x7F800000> : vector<4xf32>
      %19 = vector.multi_reduction <minimumf>, %18, %cst_16 [1] : vector<4x4xf32> to vector<4xf32>
      %20 = vector.shape_cast %19 : vector<4xf32> to vector<4x1xf32>
      %21 = vector.broadcast %20 : vector<4x1xf32> to vector<4x4xf32>
      %22 = arith.subf %21, %18 : vector<4x4xf32>
      %23 = math.exp %22 : vector<4x4xf32>
      %cst_17 = arith.constant dense<0.000000e+00> : vector<4xf32>
      %24 = vector.multi_reduction <add>, %23, %cst_17 [1] : vector<4x4xf32> to vector<4xf32>
      %25 = vector.shape_cast %24 : vector<4xf32> to vector<4x1xf32>
      %26 = tpu.reciprocal %25 : vector<4x1xf32> -> vector<4x1xf32>
      %27 = vector.broadcast %26 : vector<4x1xf32> to vector<4x4xf32>
      %28 = arith.mulf %23, %27 : vector<4x4xf32>
      %29 = arith.truncf %28 : vector<4x4xf32> to vector<4x4xbf16>
      %c0_18 = arith.constant 0 : index
      %c0_19 = arith.constant 0 : index
      %c0_20 = arith.constant 0 : index
      %30 = vector.load %arg3[%c0_18, %c0_19, %c0_20] : memref<1x4x4xbf16, #tpu.memory_space<vmem>>, vector<1x4x4xbf16>
      %31 = vector.shape_cast %30 : vector<1x4x4xbf16> to vector<4x4xbf16>
      %32 = vector.shape_cast %29 : vector<4x4xbf16> to vector<1x4x4xbf16>
      tpu.vector_store %arg3[%c0_18, %c0_19, %c0_20], %32 {strides = array<i32>} : memref<1x4x4xbf16, #tpu.memory_space<vmem>>, vector<1x4x4xbf16>,
      %33 = arith.extf %29 : vector<4x4xbf16> to vector<4x4xf32>
      %c0_21 = arith.constant 0 : index
      %c0_22 = arith.constant 0 : index
      %34 = vector.load %arg6[%c0_21, %c0_22] : memref<4x1xf32, #tpu.memory_space<vmem>>, vector<4x1xf32>
      %cst_23 = arith.constant dense<0.000000e+00> : vector<4x1xf32>
      %35 = tpu.matmul %33, %34, %cst_23 {dimension_numbers = #tpu.dot_dimension_numbers<[1], [0], [0], [1], [0, 0, 1, 1], [], []>} : vector<4x4xf32>, vector<4x1xf32>, vector<4x1xf32> -> vector<4x1xf32>
      %36 = vector.shape_cast %35 : vector<4x1xf32> to vector<1x4x1xf32>
      %cst_24 = arith.constant dense<0.000000e+00> : vector<1xf32>
      %37 = vector.multi_reduction <add>, %36, %cst_24 [1, 2] : vector<1x4x1xf32> to vector<1xf32>
      %38 = vector.shape_cast %37 : vector<1xf32> to vector<1x1x1xf32>
      %39 = vector.extract %38[0, 0, 0] : f32 from vector<1x1x1xf32>
      %40 = vector.broadcast %39 : f32 to vector<1x1x1xf32>
      %c0_25 = arith.constant 0 : index
      %c0_26 = arith.constant 0 : index
      %c0_27 = arith.constant 0 : index
      %41 = vector.load %arg4[%c0_25, %c0_26, %c0_27] : memref<1x1x1xf32, #tpu.memory_space<vmem>>, vector<1x1x1xf32>
      tpu.vector_store %arg4[%c0_25, %c0_26, %c0_27], %40 {strides = array<i32>} : memref<1x1x1xf32, #tpu.memory_space<vmem>>, vector<1x1x1xf32>,
    } else {
    }
    return
  }
  func.func @transform_0(%arg0: i32, %arg1: i32) -> (i32, i32, i32) {
    %c0_i32 = arith.constant 0 : i32
    %c0_i32_0 = arith.constant 0 : i32
    return %arg0, %c0_i32, %arg1 : i32, i32, i32
  }
  func.func @transform_1(%arg0: i32, %arg1: i32) -> (i32, i32, i32) {
    %c0_i32 = arith.constant 0 : i32
    %c0_i32_0 = arith.constant 0 : i32
    %c0_i32_1 = arith.constant 0 : i32
    return %arg0, %c0_i32, %c0_i32_0 : i32, i32, i32
  }
  func.func @transform_2(%arg0: i32, %arg1: i32) -> (i32, i32, i32) {
    %c0_i32 = arith.constant 0 : i32
    %c0_i32_0 = arith.constant 0 : i32
    %c0_i32_1 = arith.constant 0 : i32
    return %arg0, %c0_i32, %c0_i32_0 : i32, i32, i32
  }
}

</mosaic_0001>

<llo_original>
// kernel: tpu_custom_call.1
$region0: #{tpu_custom_call.1}
  #allocation0 [shape = 'u32[]', space=smem, size = 0x4, offset = 0x4, fixed_abs, tag = 'smem constant byte address 0x4 - core index']
  #allocation1 [shape = 'u32[144,128]{1,0:T(1,128)}', space=vmem, size = 0x12000, scoped, tag = 'internal scratch']
  #allocation2 [shape = 'f32[4,4]{1,0:T(4,128)}', space=vmem, size = 0x800, scoped, tag = 'scratch operand']
  #allocation3 [shape = 'f32[4,1]{1,0:T(4,128)}', space=vmem, size = 0x800, scoped, tag = 'scratch operand']
  %s0 = inlined_call_operand.hbm [shape: f32[2,4,256], index: 0, kind: input, shape index: {}]
  %s1 = inlined_call_operand.hbm [shape: bf16[2,4,4], index: 1, kind: output, shape index: {0}]
  %s2 = inlined_call_operand.hbm [shape: f32[2,1,1], index: 2, kind: output, shape index: {1}]
  %3 = xla_tuple %s1, %s2
  %s4 = sld [smem:[#allocation0]]
  $region57: #{tpu_custom_call.1} parent=0
    _
  %s6 = ssub.s32 1, %s4
  %s7 = scalar_select 0, %s6, %s4
  $region1: #{tpu_custom_call.1} parent=0
    #allocation4 [shape = 'u8[8192]{0}', space=vmem, size = 0x2000, scoped, tag = 'input window, operand 0']
    #allocation5 [shape = 's32[2]{0}', space=sflag, size = 0x8, scoped, tag = 'scoped memory for tpu_custom_call.1']
    #allocation6 [shape = 's32[2]{0}', space=sflag, size = 0x8, scoped, tag = 'scoped memory for tpu_custom_call.1']
    #allocation7 [shape = 'u8[2048]{0}', space=vmem, size = 0x800, scoped, tag = 'output window, operand 0']
    #allocation8 [shape = 'u8[1024]{0}', space=vmem, size = 0x400, scoped, tag = 'output window, operand 1']
    #allocation9 [shape = 's32[2]{0}', space=sflag, size = 0x8, scoped, tag = 'scoped memory for tpu_custom_call.1']
    %8 = vsyncpa [#allocation5], 0
    %s9 = scalar_lea.sflag [#allocation5], 1
    %10 = vsyncpa %s9, 0
    %11 = vsyncpa [#allocation6], 0
    %s12 = scalar_lea.sflag [#allocation6], 1
    %13 = vsyncpa %s12, 0
    %14 = vsyncpa [#allocation9], 0
    %s15 = scalar_lea.sflag [#allocation9], 1
    %16 = vsyncpa %s15, 0
    loop: start=0, step=1, limit=4
    $region2: #{tpu_custom_call.1} parent=1 // loop_pre_header
      _
    $region3: #{tpu_custom_call.1} parent=1 // loop_header
      %s18 = sphi 0, %s22
      %p19 = scmp.ge.s32.totalorder %s18, 4
      %s25 = sphi 0, %s37
      %s26 = sphi 0, %s33
      %s27 = sphi 0, %s25
      %s28 = sphi 0, %s26
      %s29 = sphi 0, %s27
      %s30 = sphi 0, %s28
      %s42 = sphi 0, %s44
      %s45 = sphi 0, %s42
      %s46 = sphi 0, %s45
      %s62 = sphi 0, %s46
      %s68 = sphi 0, %s70
      %s71 = sphi 0, %s68
      %s72 = sphi 0, %s71
      %s88 = sphi 0, %s72
      %s94 = sphi 0, %s96
      %s97 = sphi 0, %s94
      %s98 = sphi 0, %s97
      %s114 = sphi 0, %s98
    $region4: #{tpu_custom_call.1} parent=1 // loop_header_branch
      %21 = sbr.rel (%p19) target = $region8
    $region5: #{tpu_custom_call.1} parent=1 // loop_body
      %s23 = ssub.s32 %s18, 1
      %s24 = ssub.s32 %s18, 2
      %s31 = sadd.s32 1, %s26
      %p32 = scmp.ge.s32.totalorder %s31, 1
      %s33 = scalar_select %p32, 0, %s31
      %s34 = sadd.s32 1, %s25
      %s35 = scalar_select %p32, %s34, %s25
      %p36 = scmp.ge.s32.totalorder %s35, 2
      %s37 = scalar_select %p36, 0, %s35
      %s38 = ssub.s32 %s25, %s37
      %s39 = ssub.s32 %s26, %s33
      %s40 = sor.u32 %s38, %s39
      %p41 = scmp.eq.s32.totalorder %s40, 0
      %s43 = sadd.s32 %s42, 1
      %s44 = scalar_select %p41, %s42, %s43
      %p47 = pneg %p41
      %p48 = scmp.eq.s32.totalorder %s18, 1
      %p49 = por %p47, %p48
      %p50 = scmp.ne.s32.totalorder %s42, %s45
      %p51 = scmp.eq.s32.totalorder %s18, 0
      %p52 = por %p50, %p51
      %p53 = scmp.ne.s32.totalorder %s42, %s45
      %p54 = scmp.eq.s32.totalorder %s23, 1
      %p55 = por %p53, %p54
      %p56 = scmp.ne.s32.totalorder %s45, %s46
      %p57 = scmp.eq.s32.totalorder %s23, 0
      %p58 = por %p56, %p57
      %p59 = scmp.ne.s32.totalorder %s45, %s46
      %p60 = scmp.eq.s32.totalorder %s24, 1
      %p61 = por %p59, %p60
      %p63 = scmp.ne.s32.totalorder %s46, %s62
      %p64 = scmp.eq.s32.totalorder %s24, 0
      %p65 = por %p63, %p64
      %s66 = ssub.s32 %s25, %s37
      %p67 = scmp.eq.s32.totalorder %s66, 0
      %s69 = sadd.s32 %s68, 1
      %s70 = scalar_select %p67, %s68, %s69
      %p73 = pneg %p67
      %p74 = scmp.eq.s32.totalorder %s18, 1
      %p75 = por %p73, %p74
      %p76 = scmp.ne.s32.totalorder %s68, %s71
      %p77 = scmp.eq.s32.totalorder %s18, 0
      %p78 = por %p76, %p77
      %p79 = scmp.ne.s32.totalorder %s68, %s71
      %p80 = scmp.eq.s32.totalorder %s23, 1
      %p81 = por %p79, %p80
      %p82 = scmp.ne.s32.totalorder %s71, %s72
      %p83 = scmp.eq.s32.totalorder %s23, 0
      %p84 = por %p82, %p83
      %p85 = scmp.ne.s32.totalorder %s71, %s72
      %p86 = scmp.eq.s32.totalorder %s24, 1
      %p87 = por %p85, %p86
      %p89 = scmp.ne.s32.totalorder %s72, %s88
      %p90 = scmp.eq.s32.totalorder %s24, 0
      %p91 = por %p89, %p90
      %s92 = ssub.s32 %s25, %s37
      %p93 = scmp.eq.s32.totalorder %s92, 0
      %s95 = sadd.s32 %s94, 1
      %s96 = scalar_select %p93, %s94, %s95
      %p99 = pneg %p93
      %p100 = scmp.eq.s32.totalorder %s18, 1
      %p101 = por %p99, %p100
      %p102 = scmp.ne.s32.totalorder %s94, %s97
      %p103 = scmp.eq.s32.totalorder %s18, 0
      %p104 = por %p102, %p103
      %p105 = scmp.ne.s32.totalorder %s94, %s97
      %p106 = scmp.eq.s32.totalorder %s23, 1
      %p107 = por %p105, %p106
      %p108 = scmp.ne.s32.totalorder %s97, %s98
      %p109 = scmp.eq.s32.totalorder %s23, 0
      %p110 = por %p108, %p109
      %p111 = scmp.ne.s32.totalorder %s97, %s98
      %p112 = scmp.eq.s32.totalorder %s24, 1
      %p113 = por %p111, %p112
      %p115 = scmp.ne.s32.totalorder %s98, %s114
      %p116 = scmp.eq.s32.totalorder %s24, 0
      %p117 = por %p115, %p116
      %p118 = scmp.le.s32.totalorder 1, %s18
      %p119 = scmp.lt.s32.totalorder %s18, 3
      %p120 = pnand %p118, %p119
      %p121 = pneg %p120
      // Predicated region
      $region9: #{tpu_custom_call.1} parent=5 // pred_check
        _
      $region10: #{tpu_custom_call.1} parent=5 // pred_check_branch
        %123 = sbr.rel (%p120) target = $region12
      $region11: #{tpu_custom_call.1} parent=5 // pred_region
        %s124 = ssub.s32 %s18, 1
      $region12: #{tpu_custom_call.1} parent=5 // pred_fallthru
        _
      %p125 = scmp.lt.s32.totalorder %s18, 2
      // Predicated region
      $region13: #{tpu_custom_call.1} parent=5 // pred_check
        %p126 = pneg %p125
      $region14: #{tpu_custom_call.1} parent=5 // pred_check_branch
        %128 = sbr.rel (%p126) target = $region16
      $region15: #{tpu_custom_call.1} parent=5 // pred_region
        // Predicated region
        $region17: #{tpu_custom_call.1} parent=15 // pred_check
          %p129 = pneg %p52
        $region18: #{tpu_custom_call.1} parent=15 // pred_check_branch
          %131 = sbr.rel (%p129) target = $region20
        $region19: #{tpu_custom_call.1} parent=15 // pred_region
          %s132 = sand.u32 %s42, 1
          %s133 = scalar_lea.sflag [#allocation5], %s132
          %s134 = sand.u32 %s42, 1
          %s135 = smul.addr %s134, 8
          %s136 = scalar_lea.vmem [#allocation4], %s135
          %s137 = smul.u32 2, %s26
          %s139 = ssub.s32 128, 128
          %140 = vsyncadd %s133, %s139
          %s141 = smul.addr %s25, 2
          %s142 = sadd.s32 %s137, %s141
          %s143 = smul.addr %s142, 64
          %s144 = scalar_lea.hbm %s0, %s143
          %s146 = sshll.u32 %s136, 4
          %s147 = int_to_ptr.vmem [resolvable:$true] %s146
          %149 = dma.hbm_to_vmem [thread:$0]  %s144, 128, %s147, %s133
        $region20: #{tpu_custom_call.1} parent=15 // pred_fallthru
          _
      $region16: #{tpu_custom_call.1} parent=5 // pred_fallthru
        _
      %p150 = scmp.le.s32.totalorder 1, %s18
      %p151 = scmp.lt.s32.totalorder %s18, 3
      %p152 = pnand %p150, %p151
      %p153 = pneg %p152
      // Predicated region
      $region21: #{tpu_custom_call.1} parent=5 // pred_check
        _
      $region22: #{tpu_custom_call.1} parent=5 // pred_check_branch
        %155 = sbr.rel (%p152) target = $region24
      $region23: #{tpu_custom_call.1} parent=5 // pred_region
        %s156 = ssub.s32 %s18, 1
        %s157 = sand.u32 %s45, 1
        %s158 = scalar_lea.sflag [#allocation5], %s157
        %s159 = sand.u32 %s45, 1
        %s160 = smul.addr %s159, 8
        %s161 = scalar_lea.vmem [#allocation4], %s160
        // Predicated region
        $region25: #{tpu_custom_call.1} parent=23 // pred_check
          %p162 = pneg %p58
        $region26: #{tpu_custom_call.1} parent=23 // pred_check_branch
          %164 = sbr.rel (%p162) target = $region28
        $region27: #{tpu_custom_call.1} parent=23 // pred_region
          %165 = dma.done %s158, 128
        $region28: #{tpu_custom_call.1} parent=23 // pred_fallthru
          _
        %s166 = sand.u32 %s45, 1
        %s167 = scalar_lea.sflag [#allocation5], %s166
        %s168 = sand.u32 %s45, 1
        %s169 = smul.addr %s168, 8
        %s170 = scalar_lea.vmem [#allocation4], %s169
        %p171 = pneg %p58
        %p172 = pneg %p55
        %p173 = pneg %p84
        %p174 = pneg %p81
        %s175 = sand.u32 %s71, 1
        %s176 = scalar_lea.sflag [#allocation6], %s175
        %s177 = sand.u32 %s71, 1
        %s178 = smul.addr %s177, 2
        %s179 = scalar_lea.vmem [#allocation7], %s178
        %p180 = pneg %p110
        %p181 = pneg %p107
        %s182 = sand.u32 %s97, 1
        %s183 = scalar_lea.sflag [#allocation9], %s182
        %s184 = sand.u32 %s97, 1
        %s185 = scalar_lea.vmem [#allocation8], %s184
        %s186 = smul.u32 2, %s28
        %p188 = scmp.eq.s32.totalorder %s28, 0
        // Predicated region
        $region29: #{tpu_custom_call.1} parent=23 // pred_check
          %p189 = pneg %p188
        $region30: #{tpu_custom_call.1} parent=23 // pred_check_branch
          %191 = sbr.rel (%p189) target = $region32
        $region31: #{tpu_custom_call.1} parent=23 // pred_region
          %vm192 = vcmask 27648
          %193 = vst.msk [vmem:[#allocation2] sm:$0xf] %vm192, 0.0
          %vm194 = vcmask 3072
          %195 = vst.msk [vmem:[#allocation3] sm:$0xf] %vm194, 0.0
        $region32: #{tpu_custom_call.1} parent=23 // pred_fallthru
          _
        %v196 = vld [vmem:[%s161] sm:$0xff]
        %v198 = vcombine.high %v196, %v196
        %v200 = vpack.c.bf16 %v196, %v196
        %v201 = vpack.c.bf16 %v198, %v198
        %v202 = vld [vmem:[#allocation2] sm:$0xf]
        %203 = vmatprep.subr.bf16.mxu0 %v201
        %204 = vmatpush1.bf16.xpose.msra.mxu0 %v200
        %205 = vmatprep.subr.bf16.mxu0 0
        %206 = vmatpush1.bf16.xpose.msra.mxu0 0
        %207 = vmatprep.subr.bf16.mxu0 0
        %208 = vmatpush1.bf16.xpose.msra.mxu0 0
        %209 = vmatprep.subr.bf16.mxu0 0
        %210 = vmatpush1.bf16.xpose.msra.mxu0 0
        %211 = vmatprep.subr.bf16.mxu0 0
        %212 = vmatpush1.bf16.xpose.msra.mxu0 0
        %213 = vmatprep.subr.bf16.mxu0 0
        %214 = vmatpush1.bf16.xpose.msra.mxu0 0
        %215 = vmatprep.subr.bf16.mxu0 0
        %216 = vmatpush1.bf16.xpose.msra.mxu0 0
        %217 = vmatprep.subr.bf16.mxu0 0
        %218 = vmatpush1.bf16.xpose.msra.mxu0 0
        %219 = vmatprep.subr.bf16.mxu0 0
        %220 = vmatpush1.bf16.xpose.msra.mxu0 0
        %221 = vmatprep.subr.bf16.mxu0 0
        %222 = vmatpush1.bf16.xpose.msra.mxu0 0
        %223 = vmatprep.subr.bf16.mxu0 0
        %224 = vmatpush1.bf16.xpose.msra.mxu0 0
        %225 = vmatprep.subr.bf16.mxu0 0
        %226 = vmatpush1.bf16.xpose.msra.mxu0 0
        %227 = vmatprep.subr.bf16.mxu0 0
        %228 = vmatpush1.bf16.xpose.msra.mxu0 0
        %229 = vmatprep.subr.bf16.mxu0 0
        %230 = vmatpush1.bf16.xpose.msra.mxu0 0
        %231 = vmatprep.subr.bf16.mxu0 0
        %232 = vmatpush1.bf16.xpose.msra.mxu0 0
        %233 = vmatprep.subr.bf16.mxu0 0
        %234 = vmatpush1.bf16.xpose.msra.mxu0 0
        %235 = vmatprep.mubr.bf16.mxu0 %v201
        %236 = vmatmul.mubr.bf16.gmra.mrb[0].mxu0 %v200
        %v237 = vpop.f32.mrb[0].mxu0
        %v238 = vadd.f32 0.0, %v237
        %v239 = vpop.f32.mrb[0].mxu0
        %v240 = vpop.f32.mrb[0].mxu0
        %v241 = vpop.f32.mrb[0].mxu0
        %242 = vdwg.mxu0
        %v243 = vadd.f32 %v202, %v238
        %vm244 = vcmask 27648
        %245 = vst.msk [vmem:[#allocation2] sm:$0xf] %vm244, %v243
        %v246 = vld [vmem:[#allocation3] sm:$0xf]
        %vm247 = vcmask 1043456
        %v248 = vsel %vm247, %v196, 0.0
        %v249 = vsel %vm247, %v198, 0.0
        %v250 = vadd.f32 %v248, %v249
        %251 = vadd.xlane.f32.xlu0 %v250
        %v252 = vpop.xlane.xlu0 %251
        %v253 = vadd.f32 %v246, %v252
        %vm254 = vcmask 3072
        %255 = vst.msk [vmem:[#allocation3] sm:$0xf] %vm254, %v253
        // Predicated region
        $region33: #{tpu_custom_call.1} parent=23 // pred_check
          %p256 = pneg %p188
        $region34: #{tpu_custom_call.1} parent=23 // pred_check_branch
          %258 = sbr.rel (%p256) target = $region36
        $region35: #{tpu_custom_call.1} parent=23 // pred_region
          %v259 = vld [vmem:[#allocation2] sm:$0xf]
          %v260 = vsel %vm244, %v259, inf
          %261 = vmin.xlane.f32.xlu0 %v260
          %v262 = vpop.xlane.xlu0 %261
          %v263 = vsub.f32 %v262, %v259
          %v264 = vmul.f32 %v263, 1.442695
          %v265 = vpow.pop %v264
          %v266 = vsel %vm244, %v265, 0.0
          %267 = vadd.xlane.f32.xlu0 %v266
          %v268 = vpop.xlane.xlu0 %267
          %v269 = vrcp.pop %v268
          %v270 = vmul.f32 %v265, %v269
          %v271 = vpack.c.bf16 %v270, %v270
          %vm272 = vcmask 25600
          %273 = vst.msk [vmem:[%s179] sm:$0x3] %vm272, %v271
          %v274 = vunpack.c.l.bf16 %v271
          %v275 = vld [vmem:[#allocation3] sm:$0xf]
          %vm276 = vcmask 31744
          %v278 = vsel %vm276, %v274, 0
          %v281 = vsel %vm247, %v275, 0
          %283 = vmatprep.subr.mxu0 0.0
          %284 = vmatpush1.msra.mxu0 %v281
          %285 = vmatprep.subr.mxu0 0.0
          %286 = vmatpush1.msra.mxu0 0.0
          %287 = vmatprep.subr.mxu0 0.0
          %288 = vmatpush1.msra.mxu0 0.0
          %289 = vmatprep.subr.mxu0 0.0
          %290 = vmatpush1.msra.mxu0 0.0
          %291 = vmatprep.subr.mxu0 0.0
          %292 = vmatpush1.msra.mxu0 0.0
          %293 = vmatprep.subr.mxu0 0.0
          %294 = vmatpush1.msra.mxu0 0.0
          %295 = vmatprep.subr.mxu0 0.0
          %296 = vmatpush1.msra.mxu0 0.0
          %297 = vmatprep.subr.mxu0 0.0
          %298 = vmatpush1.msra.mxu0 0.0
          %299 = vmatprep.subr.mxu0 0.0
          %300 = vmatpush1.msra.mxu0 0.0
          %301 = vmatprep.subr.mxu0 0.0
          %302 = vmatpush1.msra.mxu0 0.0
          %303 = vmatprep.subr.mxu0 0.0
          %304 = vmatpush1.msra.mxu0 0.0
          %305 = vmatprep.subr.mxu0 0.0
          %306 = vmatpush1.msra.mxu0 0.0
          %307 = vmatprep.subr.mxu0 0.0
          %308 = vmatpush1.msra.mxu0 0.0
          %309 = vmatprep.subr.mxu0 0.0
          %310 = vmatpush1.msra.mxu0 0.0
          %311 = vmatprep.subr.mxu0 0.0
          %312 = vmatpush1.msra.mxu0 0.0
          %313 = vmatprep.subr.mxu0 0.0
          %314 = vmatpush1.msra.mxu0 0.0
          %315 = vmatprep.subr.mxu0 0.0
          %316 = vmatpush1.msra.mxu0 0.0
          %317 = vmatprep.subr.mxu0 0.0
          %318 = vmatpush1.msra.mxu0 0.0
          %319 = vmatprep.subr.mxu0 0.0
          %320 = vmatpush1.msra.mxu0 0.0
          %321 = vmatprep.subr.mxu0 0.0
          %322 = vmatpush1.msra.mxu0 0.0
          %323 = vmatprep.subr.mxu0 0.0
          %324 = vmatpush1.msra.mxu0 0.0
          %325 = vmatprep.subr.mxu0 0.0
          %326 = vmatpush1.msra.mxu0 0.0
          %327 = vmatprep.subr.mxu0 0.0
          %328 = vmatpush1.msra.mxu0 0.0
          %329 = vmatprep.subr.mxu0 0.0
          %330 = vmatpush1.msra.mxu0 0.0
          %331 = vmatprep.subr.mxu0 0.0
          %332 = vmatpush1.msra.mxu0 0.0
          %333 = vmatprep.subr.mxu0 0.0
          %334 = vmatpush1.msra.mxu0 0.0
          %335 = vmatprep.subr.mxu0 0.0
          %336 = vmatpush1.msra.mxu0 0.0
          %337 = vmatprep.subr.mxu0 0.0
          %338 = vmatpush1.msra.mxu0 0.0
          %339 = vmatprep.subr.mxu0 0.0
          %340 = vmatpush1.msra.mxu0 0.0
          %341 = vmatprep.subr.mxu0 0.0
          %342 = vmatpush1.msra.mxu0 0.0
          %343 = vmatprep.subr.mxu0 0.0
          %344 = vmatpush1.msra.mxu0 0.0
          %345 = vmatprep.subr.mxu0 0.0
          %346 = vmatpush1.msra.mxu0 0.0
          %347 = vmatprep.mubr.f32.mxu0 0.0
          %348 = vmatmul.mubr.f32.gmra.mrb[0].mxu0 %v278
          %v349 = vpop.f32.mrb[0].mxu0
          %v350 = vadd.f32 0.0, %v349
          %v351 = vpop.f32.mrb[0].mxu0
          %352 = vdwg.mxu0
          %v353 = vsel %vm254, %v350, 0.0
          %354 = vadd.xlane.f32.xlu0 %v353
          %v355 = vpop.xlane.xlu0 %354
          %v356 = vrot.slane %v355, 4
          %v357 = vadd.f32 %v355, %v356
          %v358 = vrot.slane %v357, 2
          %v359 = vadd.f32 %v357, %v358
          %v360 = vrot.slane %v359, 1
          %v361 = vadd.f32 %v359, %v360
          %s362 = vtos %v361
          %v363 = vstv %s362
          %vm364 = vcmask 0
          %365 = vst.msk [vmem:[%s185] sm:$0x1] %vm364, %v363
        $region36: #{tpu_custom_call.1} parent=23 // pred_fallthru
          _
        %s366 = sand.u32 %s71, 1
        %s367 = scalar_lea.sflag [#allocation6], %s366
        %s368 = sand.u32 %s71, 1
        %s369 = smul.addr %s368, 2
        %s370 = scalar_lea.vmem [#allocation7], %s369
        %s371 = sand.u32 %s97, 1
        %s372 = scalar_lea.sflag [#allocation9], %s371
        %s373 = sand.u32 %s97, 1
        %s374 = scalar_lea.vmem [#allocation8], %s373
        // Predicated region
        $region37: #{tpu_custom_call.1} parent=23 // pred_check
          %p375 = pneg %p81
        $region38: #{tpu_custom_call.1} parent=23 // pred_check_branch
          %377 = sbr.rel (%p375) target = $region40
        $region39: #{tpu_custom_call.1} parent=23 // pred_region
          %s379 = ssub.s32 32, 32
          %380 = vsyncadd %s367, %s379
          %s381 = smul.addr %s27, 32
          %s382 = scalar_lea.hbm %s1, %s381
          %s384 = sshll.u32 %s370, 4
          %s385 = int_to_ptr.vmem [resolvable:$true] %s384
          %387 = dma.vmem_to_hbm [thread:$0]  %s385, 32, %s382, %s367
        $region40: #{tpu_custom_call.1} parent=23 // pred_fallthru
          _
        // Predicated region
        $region41: #{tpu_custom_call.1} parent=23 // pred_check
          %p388 = pneg %p107
        $region42: #{tpu_custom_call.1} parent=23 // pred_check_branch
          %390 = sbr.rel (%p388) target = $region44
        $region43: #{tpu_custom_call.1} parent=23 // pred_region
          %s392 = ssub.s32 16, 16
          %393 = vsyncadd %s372, %s392
          %s394 = smul.addr %s27, 16
          %s395 = scalar_lea.hbm %s2, %s394
          %s397 = sshll.u32 %s374, 4
          %s398 = int_to_ptr.vmem [resolvable:$true] %s397
          %400 = dma.vmem_to_hbm [thread:$0]  %s398, 16, %s395, %s372
        $region44: #{tpu_custom_call.1} parent=23 // pred_fallthru
          _
      $region24: #{tpu_custom_call.1} parent=5 // pred_fallthru
        _
      %p401 = scmp.le.s32.totalorder 2, %s18
      // Predicated region
      $region45: #{tpu_custom_call.1} parent=5 // pred_check
        %p402 = pneg %p401
      $region46: #{tpu_custom_call.1} parent=5 // pred_check_branch
        %404 = sbr.rel (%p402) target = $region48
      $region47: #{tpu_custom_call.1} parent=5 // pred_region
        %s405 = ssub.s32 %s18, 2
        // Predicated region
        $region49: #{tpu_custom_call.1} parent=47 // pred_check
          %p406 = pneg %p87
        $region50: #{tpu_custom_call.1} parent=47 // pred_check_branch
          %408 = sbr.rel (%p406) target = $region52
        $region51: #{tpu_custom_call.1} parent=47 // pred_region
          %s409 = sand.u32 %s72, 1
          %s410 = scalar_lea.sflag [#allocation6], %s409
          %s411 = sand.u32 %s72, 1
          %s412 = smul.addr %s411, 2
          %s413 = scalar_lea.vmem [#allocation7], %s412
          %414 = dma.done %s410, 32
        $region52: #{tpu_custom_call.1} parent=47 // pred_fallthru
          _
        // Predicated region
        $region53: #{tpu_custom_call.1} parent=47 // pred_check
          %p415 = pneg %p113
        $region54: #{tpu_custom_call.1} parent=47 // pred_check_branch
          %417 = sbr.rel (%p415) target = $region56
        $region55: #{tpu_custom_call.1} parent=47 // pred_region
          %s418 = sand.u32 %s98, 1
          %s419 = scalar_lea.sflag [#allocation9], %s418
          %s420 = sand.u32 %s98, 1
          %s421 = scalar_lea.vmem [#allocation8], %s420
          %422 = dma.done %s419, 16
        $region56: #{tpu_custom_call.1} parent=47 // pred_fallthru
          _
      $region48: #{tpu_custom_call.1} parent=5 // pred_fallthru
        _
    $region6: #{tpu_custom_call.1} parent=1 // loop_footer
      %s22 = sadd.s32 1, %s18
    $region7: #{tpu_custom_call.1} parent=1 // loop_footer_branch
      %17 = sbr.rel target = $region3
    $region8: #{tpu_custom_call.1} parent=1 // loop_exit
      _
    %423 = vsyncpa [#allocation5], 1
    %s424 = scalar_lea.sflag [#allocation5], 1
    %425 = vsyncpa %s424, 1
    %426 = vsyncpa [#allocation6], 1
    %s427 = scalar_lea.sflag [#allocation6], 1
    %428 = vsyncpa %s427, 1
    %429 = vsyncpa [#allocation9], 1
    %s430 = scalar_lea.sflag [#allocation9], 1
    %431 = vsyncpa %s430, 1

</llo_original>
